<compile_context>
chip_gen: v6e
topology: v6e:2x2x1
jax: 0.10.0
libtpu: 0.0.40
codegen_flags: <defaults>
</compile_context>

<pallas_src>
import functools

import jax
import jax.numpy as jnp
from jax import lax
from jax.experimental import pallas as pl
from jax.experimental.pallas import tpu as pltpu


def _focal_loss_kernel(logit_ref, tgt_ref, alpha_ref, out_ref, *,
                       gamma, smooth, hw, tile):
    x = logit_ref[0].astype(jnp.float32)        # (C, tile)  classes on sublanes
    tgt = tgt_ref[0]                            # (1, tile)  int32
    alpha = alpha_ref[...].astype(jnp.float32)  # (C, 1)
    c = x.shape[0]

    # Mask for a ragged last tile (block may extend past H*W).
    ragged = (hw % tile) != 0
    if ragged:
        pix = pl.program_id(1) * tile + lax.broadcasted_iota(
            jnp.int32, (1, tile), 1)
        valid = pix < hw                        # (1, tile)
        x = jnp.where(valid, x, 0.0)            # keep padded lanes finite

    # Softmax over the class (sublane) axis; small C -> a few unrolled ops.
    m = jnp.max(x, axis=0, keepdims=True)       # (1, tile)
    e = jnp.exp(x - m)                          # (C, tile)
    prob = e / jnp.sum(e, axis=0, keepdims=True)

    # Gather prob / alpha at the target class via a one-hot mask over C
    # (no dynamic gather on TPU; C is tiny so this is a few VPU ops).
    cls_ids = lax.broadcasted_iota(jnp.int32, (c, tile), 0)
    onehot = (cls_ids == tgt).astype(jnp.float32)                # (C, tile)

    pt = jnp.sum(prob * onehot, axis=0, keepdims=True) + smooth  # (1, tile)
    logpt = jnp.log(pt)
    alpha_w = jnp.sum(alpha * onehot, axis=0, keepdims=True)     # (1, tile)

    one_minus_pt = 1.0 - pt
    if float(gamma).is_integer():
        # Integer gamma (the default, gamma=2): pure VPU multiplies, and
        # NaN-safe when smoothing pushes pt slightly above 1 (matches
        # torch.pow semantics for integer exponents).
        focal = lax.integer_pow(one_minus_pt, int(gamma))
    else:
        # Float gamma lowers to exp/log on the EUP; clamp base to avoid NaN.
        focal = jnp.power(jnp.maximum(one_minus_pt, 0.0), gamma)

    loss = -alpha_w * focal * logpt             # (1, tile)
    if ragged:
        loss = jnp.where(valid, loss, 0.0)

    # One partial sum per block, broadcast across a lane-dense (1,1,128)
    # output block (unmasked store); the wrapper reads lane 0 only.
    out_ref[...] = jnp.broadcast_to(jnp.sum(loss), (1, 1, 128))


def _pick_tile(hw, c, itemsize, vmem_budget_bytes):
    """Largest lane tile (multiple of 128) keeping double-buffered input
    blocks plus f32 intermediates under the VMEM budget."""
    # per-lane-column bytes: 2x (double-buffer) logits + targets, plus a
    # handful of f32 (C, t)/(1, t) temporaries live inside the kernel.
    per_col = 2 * (c * itemsize + 4) + 8 * c * 4 + 8 * 4
    max_t = max(128, (vmem_budget_bytes // per_col) // 128 * 128)
    max_t = min(max_t, 32768)  # plenty to amortize per-grid-step overhead
    return hw if hw <= max_t else max_t


def multi_focal_loss(logit, target, alpha, gamma=2.0, smooth=1e-4,
                     reduction="mean", tile=None,
                     vmem_budget_bytes=24 * 1024 * 1024):
    """logit: (N, C, H, W) float, target: (N, H, W) int, alpha: (C,) float."""
    N, C, H, W = logit.shape
    HW = H * W

    # Free views only -- no transpose / extra HBM copy in the wrapper.
    logit3 = logit.reshape(N, C, HW)
    tgt3 = target.reshape(N, 1, HW).astype(jnp.int32)
    alpha2 = jnp.asarray(alpha, jnp.float32).reshape(C, 1)

    if tile is None:
        tile = _pick_tile(HW, C, jnp.dtype(logit.dtype).itemsize,
                          vmem_budget_bytes)
    tile = min(tile, HW)
    num_tiles = pl.cdiv(HW, tile)

    kernel = functools.partial(_focal_loss_kernel, gamma=float(gamma),
                               smooth=float(smooth), hw=HW, tile=tile)

    partials = pl.pallas_call(
        kernel,
        out_shape=jax.ShapeDtypeStruct((N, num_tiles, 128), jnp.float32),
        grid_spec=pltpu.PrefetchScalarGridSpec(
            num_scalar_prefetch=0,
            grid=(N, num_tiles),
            in_specs=[
                pl.BlockSpec((1, C, tile), lambda n, t: (n, 0, t)),
                pl.BlockSpec((1, 1, tile), lambda n, t: (n, 0, t)),
                pl.BlockSpec((C, 1), lambda n, t: (0, 0)),
            ],
            out_specs=pl.BlockSpec((1, 1, 128), lambda n, t: (n, t, 0)),
        ),
        compiler_params=pltpu.CompilerParams(
            dimension_semantics=("parallel", "parallel"),
            vmem_limit_bytes=48 * 1024 * 1024),
    )(logit3, tgt3, alpha2)

    total = jnp.sum(partials[:, :, 0])   # tiny tree-sum of per-block partials
    if reduction == "mean":
        return total / (N * HW)
    elif reduction == "sum":
        return total
    else:
        # TODO(synk): reduction='none' would need a per-pixel (N, H, W) output
        # instead of per-block partial sums; only 'mean'/'sum' are wired up.
        raise NotImplementedError("only 'mean'/'sum' reductions implemented")


def _reference(logit, target, alpha, gamma=2.0, smooth=1e-4):
    N, C, H, W = logit.shape
    prob = jax.nn.softmax(logit, axis=1)
    prob = jnp.transpose(prob, (0, 2, 3, 1)).reshape(-1, C)
    tgt = target.reshape(-1)
    pt = jnp.take_along_axis(prob, tgt[:, None], axis=1)[:, 0] + smooth
    logpt = jnp.log(pt)
    aw = alpha[tgt]
    loss = -aw * (1.0 - pt) ** gamma * logpt
    return loss.mean()


if __name__ == "__main__":
    key = jax.random.PRNGKey(0)
    N, C, H, W = 2, 4, 16, 16  # num_class = 4
    k1, k2 = jax.random.split(key)

    logit = jax.random.normal(k1, (N, C, H, W), dtype=jnp.float32)
    target = jax.random.randint(k2, (N, H, W), 0, C, dtype=jnp.int32)
    # MultiFocalLoss.__init__ with alpha=None: alpha = ones(num_class) - 0.5
    alpha = jnp.ones((C,), dtype=jnp.float32) - 0.5

    out = multi_focal_loss(logit, target, alpha, gamma=2.0, reduction="mean")
    out = jax.block_until_ready(out)

    ref = _reference(logit, target, alpha, gamma=2.0)
    assert jnp.allclose(out, ref, rtol=1e-5, atol=1e-6), (out, ref)

    print("KERNEL_OK")
</pallas_src>

<mosaic_0001>
module attributes {stable_mosaic.version = 11 : i64} {
  func.func @_focal_loss_kernel(%arg0: i32, %arg1: i32, %arg2: memref<1x4x256xf32, #tpu.memory_space<vmem>>, %arg3: memref<1x1x256xi32, #tpu.memory_space<vmem>>, %arg4: memref<4x1xf32, #tpu.memory_space<vmem>>, %arg5: memref<1x1x128xf32, #tpu.memory_space<vmem>>) attributes {dimension_semantics = [#tpu.dimension_semantics<parallel>, #tpu.dimension_semantics<parallel>], iteration_bounds = array<i64: 2, 1>, scalar_prefetch = 0 : i64, scratch_operands = 0 : i64, tpu.core_type = #tpu.core_type<tc>, window_params = [{transform_indices = @transform_0, window_bounds = array<i64: 1, 4, 256>}, {transform_indices = @transform_1, window_bounds = array<i64: 1, 1, 256>}, {pipeline_mode = #tpu.pipeline_mode<synchronous>, transform_indices = @transform_2, window_bounds = array<i64: 4, 1>}, {transform_indices = @transform_3, window_bounds = array<i64: 1, 1, 128>}]} {
    %c0 = arith.constant 0 : index
    %c0_0 = arith.constant 0 : index
    %c0_1 = arith.constant 0 : index
    %0 = vector.load %arg2[%c0, %c0_0, %c0_1] : memref<1x4x256xf32, #tpu.memory_space<vmem>>, vector<1x4x256xf32>
    %1 = vector.shape_cast %0 : vector<1x4x256xf32> to vector<4x256xf32>
    %c0_2 = arith.constant 0 : index
    %c0_3 = arith.constant 0 : index
    %c0_4 = arith.constant 0 : index
    %2 = vector.load %arg3[%c0_2, %c0_3, %c0_4] : memref<1x1x256xi32, #tpu.memory_space<vmem>>, vector<1x1x256xi32>
    %3 = vector.shape_cast %2 : vector<1x1x256xi32> to vector<1x256xi32>
    %c0_5 = arith.constant 0 : index
    %c0_6 = arith.constant 0 : index
    %4 = vector.load %arg4[%c0_5, %c0_6] : memref<4x1xf32, #tpu.memory_space<vmem>>, vector<4x1xf32>
    %cst = arith.constant dense<0xFF800000> : vector<256xf32>
    %5 = vector.multi_reduction <maximumf>, %1, %cst [0] : vector<4x256xf32> to vector<256xf32>
    %6 = vector.shape_cast %5 : vector<256xf32> to vector<1x256xf32>
    %7 = vector.broadcast %6 : vector<1x256xf32> to vector<4x256xf32>
    %8 = arith.subf %1, %7 : vector<4x256xf32>
    %9 = math.exp %8 : vector<4x256xf32>
    %cst_7 = arith.constant dense<0.000000e+00> : vector<256xf32>
    %10 = vector.multi_reduction <add>, %9, %cst_7 [0] : vector<4x256xf32> to vector<256xf32>
    %11 = vector.shape_cast %10 : vector<256xf32> to vector<1x256xf32>
    %12 = vector.broadcast %11 : vector<1x256xf32> to vector<4x256xf32>
    %13 = arith.divf %9, %12 : vector<4x256xf32>
    %14 = tpu.iota {dimensions = array<i32: 0>} : vector<4x256xi32>
    %15 = vector.broadcast %3 : vector<1x256xi32> to vector<4x256xi32>
    %16 = arith.cmpi eq, %14, %15 : vector<4x256xi32>
    %17 = arith.extui %16 : vector<4x256xi1> to vector<4x256xi32>
    %18 = arith.sitofp %17 : vector<4x256xi32> to vector<4x256xf32>
    %19 = arith.mulf %13, %18 : vector<4x256xf32>
    %cst_8 = arith.constant dense<0.000000e+00> : vector<256xf32>
    %20 = vector.multi_reduction <add>, %19, %cst_8 [0] : vector<4x256xf32> to vector<256xf32>
    %21 = vector.shape_cast %20 : vector<256xf32> to vector<1x256xf32>
    %cst_9 = arith.constant 9.99999974E-5 : f32
    %22 = vector.broadcast %cst_9 : f32 to vector<1x256xf32>
    %23 = arith.addf %21, %22 : vector<1x256xf32>
    %24 = math.log %23 : vector<1x256xf32>
    %25 = vector.broadcast %4 : vector<4x1xf32> to vector<4x256xf32>
    %26 = arith.mulf %25, %18 : vector<4x256xf32>
    %cst_10 = arith.constant dense<0.000000e+00> : vector<256xf32>
    %27 = vector.multi_reduction <add>, %26, %cst_10 [0] : vector<4x256xf32> to vector<256xf32>
    %28 = vector.shape_cast %27 : vector<256xf32> to vector<1x256xf32>
    %cst_11 = arith.constant 1.000000e+00 : f32
    %29 = vector.broadcast %cst_11 : f32 to vector<1x256xf32>
    %30 = arith.subf %29, %23 : vector<1x256xf32>
    %31 = arith.mulf %30, %30 : vector<1x256xf32>
    %cst_12 = arith.constant 0.000000e+00 : f32
    %32 = vector.broadcast %cst_12 : f32 to vector<1x256xf32>
    %33 = arith.subf %32, %28 : vector<1x256xf32>
    %34 = arith.mulf %33, %31 : vector<1x256xf32>
    %35 = arith.mulf %34, %24 : vector<1x256xf32>
    %36 = vector.shape_cast %35 : vector<1x256xf32> to vector<1x1x256xf32>
    %cst_13 = arith.constant dense<0.000000e+00> : vector<1xf32>
    %37 = vector.multi_reduction <add>, %36, %cst_13 [1, 2] : vector<1x1x256xf32> to vector<1xf32>
    %38 = vector.shape_cast %37 : vector<1xf32> to vector<1x1x1xf32>
    %39 = vector.extract %38[0, 0, 0] : f32 from vector<1x1x1xf32>
    %40 = vector.broadcast %39 : f32 to vector<1x1x128xf32>
    %c0_14 = arith.constant 0 : index
    %c0_15 = arith.constant 0 : index
    %c0_16 = arith.constant 0 : index
    %41 = vector.load %arg5[%c0_14, %c0_15, %c0_16] : memref<1x1x128xf32, #tpu.memory_space<vmem>>, vector<1x1x128xf32>
    tpu.vector_store %arg5[%c0_14, %c0_15, %c0_16], %40 {strides = array<i32>} : memref<1x1x128xf32, #tpu.memory_space<vmem>>, vector<1x1x128xf32>,
    return
  }
  func.func @transform_0(%arg0: i32, %arg1: i32) -> (i32, i32, i32) {
    %c0_i32 = arith.constant 0 : i32
    %c0_i32_0 = arith.constant 0 : i32
    return %arg0, %c0_i32, %arg1 : i32, i32, i32
  }
  func.func @transform_1(%arg0: i32, %arg1: i32) -> (i32, i32, i32) {
    %c0_i32 = arith.constant 0 : i32
    %c0_i32_0 = arith.constant 0 : i32
    return %arg0, %c0_i32, %arg1 : i32, i32, i32
  }
  func.func @transform_2(%arg0: i32, %arg1: i32) -> (i32, i32) {
    %c0_i32 = arith.constant 0 : i32
    %c0_i32_0 = arith.constant 0 : i32
    %c0_i32_1 = arith.constant 0 : i32
    return %c0_i32, %c0_i32_0 : i32, i32
  }
  func.func @transform_3(%arg0: i32, %arg1: i32) -> (i32, i32, i32) {
    %c0_i32 = arith.constant 0 : i32
    %c0_i32_0 = arith.constant 0 : i32
    return %arg0, %arg1, %c0_i32 : i32, i32, i32
  }
}

</mosaic_0001>

<llo_original>
// kernel: tpu_custom_call.1
$region0: #{tpu_custom_call.1}
  #allocation0 [shape = 'u32[]', space=smem, size = 0x4, offset = 0x4, fixed_abs, tag = 'smem constant byte address 0x4 - core index']
  #allocation1 [shape = 'u32[144,128]{1,0:T(1,128)}', space=vmem, size = 0x12000, scoped, tag = 'internal scratch']
  %s0 = inlined_call_operand.hbm [shape: f32[2,4,256], index: 0, kind: input, shape index: {}]
  %s1 = inlined_call_operand.vmem [shape: s32[2,1,256], index: 1, kind: input, shape index: {}]
  %s2 = inlined_call_operand.vmem [shape: f32[4,1], index: 2, kind: input, shape index: {}]
  %s3 = inlined_call_operand.hbm [shape: f32[2,1,128], index: 3, kind: output, shape index: {}]
  %s4 = sld [smem:[#allocation0]]
  $region49: #{tpu_custom_call.1} parent=0
    _
  %s6 = ssub.s32 1, %s4
  %s7 = scalar_select 0, %s6, %s4
  $region1: #{tpu_custom_call.1} parent=0
    #allocation2 [shape = 'u8[8192]{0}', space=vmem, size = 0x2000, scoped, tag = 'input window, operand 0']
    #allocation3 [shape = 's32[2]{0}', space=sflag, size = 0x8, scoped, tag = 'scoped memory for tpu_custom_call.1']
    #allocation4 [shape = 's32[2]{0}', space=sflag, size = 0x8, scoped, tag = 'scoped memory for tpu_custom_call.1']
    #allocation5 [shape = 'u8[1024]{0}', space=vmem, size = 0x400, scoped, tag = 'output window, operand 0']
    %8 = vsyncpa [#allocation3], 0
    %s9 = scalar_lea.sflag [#allocation3], 1
    %10 = vsyncpa %s9, 0
    %11 = vsyncpa [#allocation4], 0
    %s12 = scalar_lea.sflag [#allocation4], 1
    %13 = vsyncpa %s12, 0
    loop: start=0, step=1, limit=4
    $region2: #{tpu_custom_call.1} parent=1 // loop_pre_header
      _
    $region3: #{tpu_custom_call.1} parent=1 // loop_header
      %s15 = sphi 0, %s19
      %p16 = scmp.ge.s32.totalorder %s15, 4
      %s22 = sphi 0, %s34
      %s23 = sphi 0, %s30
      %s24 = sphi 0, %s22
      %s25 = sphi 0, %s23
      %s26 = sphi 0, %s24
      %s27 = sphi 0, %s25
      %s39 = sphi 0, %s41
      %s42 = sphi 0, %s39
      %s43 = sphi 0, %s42
      %s59 = sphi 0, %s43
      %s67 = sphi 0, %s69
      %s70 = sphi 0, %s67
      %s71 = sphi 0, %s70
      %s87 = sphi 0, %s71
      %s91 = sphi 0, %s91
      %s93 = sphi 0, %s91
      %s94 = sphi 0, %s93
      %s108 = sphi 0, %s94
      %s116 = sphi 0, %s118
      %s119 = sphi 0, %s116
      %s120 = sphi 0, %s119
      %s136 = sphi 0, %s120
    $region4: #{tpu_custom_call.1} parent=1 // loop_header_branch
      %18 = sbr.rel (%p16) target = $region8
    $region5: #{tpu_custom_call.1} parent=1 // loop_body
      %s20 = ssub.s32 %s15, 1
      %s21 = ssub.s32 %s15, 2
      %s28 = sadd.s32 1, %s23
      %p29 = scmp.ge.s32.totalorder %s28, 1
      %s30 = scalar_select %p29, 0, %s28
      %s31 = sadd.s32 1, %s22
      %s32 = scalar_select %p29, %s31, %s22
      %p33 = scmp.ge.s32.totalorder %s32, 2
      %s34 = scalar_select %p33, 0, %s32
      %s35 = ssub.s32 %s22, %s34
      %s36 = ssub.s32 %s23, %s30
      %s37 = sor.u32 %s35, %s36
      %p38 = scmp.eq.s32.totalorder %s37, 0
      %s40 = sadd.s32 %s39, 1
      %s41 = scalar_select %p38, %s39, %s40
      %p44 = pneg %p38
      %p45 = scmp.eq.s32.totalorder %s15, 1
      %p46 = por %p44, %p45
      %p47 = scmp.ne.s32.totalorder %s39, %s42
      %p48 = scmp.eq.s32.totalorder %s15, 0
      %p49 = por %p47, %p48
      %p50 = scmp.ne.s32.totalorder %s39, %s42
      %p51 = scmp.eq.s32.totalorder %s20, 1
      %p52 = por %p50, %p51
      %p53 = scmp.ne.s32.totalorder %s42, %s43
      %p54 = scmp.eq.s32.totalorder %s20, 0
      %p55 = por %p53, %p54
      %p56 = scmp.ne.s32.totalorder %s42, %s43
      %p57 = scmp.eq.s32.totalorder %s21, 1
      %p58 = por %p56, %p57
      %p60 = scmp.ne.s32.totalorder %s43, %s59
      %p61 = scmp.eq.s32.totalorder %s21, 0
      %p62 = por %p60, %p61
      %s63 = ssub.s32 %s22, %s34
      %s64 = ssub.s32 %s23, %s30
      %s65 = sor.u32 %s63, %s64
      %p66 = scmp.eq.s32.totalorder %s65, 0
      %s68 = sadd.s32 %s67, 1
      %s69 = scalar_select %p66, %s67, %s68
      %p72 = pneg %p66
      %p73 = scmp.eq.s32.totalorder %s15, 1
      %p74 = por %p72, %p73
      %p75 = scmp.ne.s32.totalorder %s67, %s70
      %p76 = scmp.eq.s32.totalorder %s15, 0
      %p77 = por %p75, %p76
      %p78 = scmp.ne.s32.totalorder %s67, %s70
      %p79 = scmp.eq.s32.totalorder %s20, 1
      %p80 = por %p78, %p79
      %p81 = scmp.ne.s32.totalorder %s70, %s71
      %p82 = scmp.eq.s32.totalorder %s20, 0
      %p83 = por %p81, %p82
      %p84 = scmp.ne.s32.totalorder %s70, %s71
      %p85 = scmp.eq.s32.totalorder %s21, 1
      %p86 = por %p84, %p85
      %p88 = scmp.ne.s32.totalorder %s71, %s87
      %p89 = scmp.eq.s32.totalorder %s21, 0
      %p90 = por %p88, %p89
      %s92 = sadd.s32 %s91, 1
      %p95 = scmp.eq.s32.totalorder %s15, 1
      %p96 = scmp.ne.s32.totalorder %s91, %s93
      %p97 = scmp.eq.s32.totalorder %s15, 0
      %p98 = por %p96, %p97
      %p99 = scmp.ne.s32.totalorder %s91, %s93
      %p100 = scmp.eq.s32.totalorder %s20, 1
      %p101 = por %p99, %p100
      %p102 = scmp.ne.s32.totalorder %s93, %s94
      %p103 = scmp.eq.s32.totalorder %s20, 0
      %p104 = por %p102, %p103
      %p105 = scmp.ne.s32.totalorder %s93, %s94
      %p106 = scmp.eq.s32.totalorder %s21, 1
      %p107 = por %p105, %p106
      %p109 = scmp.ne.s32.totalorder %s94, %s108
      %p110 = scmp.eq.s32.totalorder %s21, 0
      %p111 = por %p109, %p110
      %s112 = ssub.s32 %s22, %s34
      %s113 = ssub.s32 %s23, %s30
      %s114 = sor.u32 %s112, %s113
      %p115 = scmp.eq.s32.totalorder %s114, 0
      %s117 = sadd.s32 %s116, 1
      %s118 = scalar_select %p115, %s116, %s117
      %p121 = pneg %p115
      %p122 = scmp.eq.s32.totalorder %s15, 1
      %p123 = por %p121, %p122
      %p124 = scmp.ne.s32.totalorder %s116, %s119
      %p125 = scmp.eq.s32.totalorder %s15, 0
      %p126 = por %p124, %p125
      %p127 = scmp.ne.s32.totalorder %s116, %s119
      %p128 = scmp.eq.s32.totalorder %s20, 1
      %p129 = por %p127, %p128
      %p130 = scmp.ne.s32.totalorder %s119, %s120
      %p131 = scmp.eq.s32.totalorder %s20, 0
      %p132 = por %p130, %p131
      %p133 = scmp.ne.s32.totalorder %s119, %s120
      %p134 = scmp.eq.s32.totalorder %s21, 1
      %p135 = por %p133, %p134
      %p137 = scmp.ne.s32.totalorder %s120, %s136
      %p138 = scmp.eq.s32.totalorder %s21, 0
      %p139 = por %p137, %p138
      %p140 = scmp.le.s32.totalorder 1, %s15
      %p141 = scmp.lt.s32.totalorder %s15, 3
      %p142 = pnand %p140, %p141
      %p143 = pneg %p142
      // Predicated region
      $region9: #{tpu_custom_call.1} parent=5 // pred_check
        _
      $region10: #{tpu_custom_call.1} parent=5 // pred_check_branch
        %145 = sbr.rel (%p142) target = $region12
      $region11: #{tpu_custom_call.1} parent=5 // pred_region
        %s146 = ssub.s32 %s15, 1
        // Predicated region
        $region13: #{tpu_custom_call.1} parent=11 // pred_check
          %p147 = pneg %p104
        $region14: #{tpu_custom_call.1} parent=11 // pred_check_branch
          %149 = sbr.rel (%p147) target = $region16
        $region15: #{tpu_custom_call.1} parent=11 // pred_region
          _
        $region16: #{tpu_custom_call.1} parent=11 // pred_fallthru
          _
      $region12: #{tpu_custom_call.1} parent=5 // pred_fallthru
        _
      %p150 = scmp.lt.s32.totalorder %s15, 2
      // Predicated region
      $region17: #{tpu_custom_call.1} parent=5 // pred_check
        %p151 = pneg %p150
      $region18: #{tpu_custom_call.1} parent=5 // pred_check_branch
        %153 = sbr.rel (%p151) target = $region20
      $region19: #{tpu_custom_call.1} parent=5 // pred_region
        // Predicated region
        $region21: #{tpu_custom_call.1} parent=19 // pred_check
          %p154 = pneg %p49
        $region22: #{tpu_custom_call.1} parent=19 // pred_check_branch
          %156 = sbr.rel (%p154) target = $region24
        $region23: #{tpu_custom_call.1} parent=19 // pred_region
          %s157 = sand.u32 %s39, 1
          %s158 = scalar_lea.sflag [#allocation3], %s157
          %s159 = sand.u32 %s39, 1
          %s160 = smul.addr %s159, 8
          %s161 = scalar_lea.vmem [#allocation2], %s160
          %s162 = smul.u32 2, %s23
          %s164 = ssub.s32 128, 128
          %165 = vsyncadd %s158, %s164
          %s166 = smul.addr %s22, 2
          %s167 = sadd.s32 %s162, %s166
          %s168 = smul.addr %s167, 64
          %s169 = scalar_lea.hbm %s0, %s168
          %s171 = sshll.u32 %s161, 4
          %s172 = int_to_ptr.vmem [resolvable:$true] %s171
          %174 = dma.hbm_to_vmem [thread:$0]  %s169, 128, %s172, %s158
        $region24: #{tpu_custom_call.1} parent=19 // pred_fallthru
          _
        // Predicated region
        $region25: #{tpu_custom_call.1} parent=19 // pred_check
          %p175 = pneg %p77
        $region26: #{tpu_custom_call.1} parent=19 // pred_check_branch
          %177 = sbr.rel (%p175) target = $region28
        $region27: #{tpu_custom_call.1} parent=19 // pred_region
          %s178 = smul.u32 2, %s23
          %p179 = scmp.lt.s32.totalorder %s22, 1
          %s180 = scalar_select %p179, %s22, 1
          %p181 = scmp.lt.s32.totalorder %s178, 1
          %s182 = scalar_select %p181, %s178, 1
          %s183 = smul.addr %s180, 2
          %s184 = sadd.s32 %s182, %s183
          %s185 = scalar_lea.vmem %s1, %s184
          %s186 = smul.u32 2, %s23
        $region28: #{tpu_custom_call.1} parent=19 // pred_fallthru
          _
      $region20: #{tpu_custom_call.1} parent=5 // pred_fallthru
        _
      %p187 = scmp.le.s32.totalorder 1, %s15
      %p188 = scmp.lt.s32.totalorder %s15, 3
      %p189 = pnand %p187, %p188
      %p190 = pneg %p189
      // Predicated region
      $region29: #{tpu_custom_call.1} parent=5 // pred_check
        _
      $region30: #{tpu_custom_call.1} parent=5 // pred_check_branch
        %192 = sbr.rel (%p189) target = $region32
      $region31: #{tpu_custom_call.1} parent=5 // pred_region
        %s193 = ssub.s32 %s15, 1
        %s194 = sand.u32 %s42, 1
        %s195 = scalar_lea.sflag [#allocation3], %s194
        %s196 = sand.u32 %s42, 1
        %s197 = smul.addr %s196, 8
        %s198 = scalar_lea.vmem [#allocation2], %s197
        // Predicated region
        $region33: #{tpu_custom_call.1} parent=31 // pred_check
          %p199 = pneg %p55
        $region34: #{tpu_custom_call.1} parent=31 // pred_check_branch
          %201 = sbr.rel (%p199) target = $region36
        $region35: #{tpu_custom_call.1} parent=31 // pred_region
          %202 = dma.done %s195, 128
        $region36: #{tpu_custom_call.1} parent=31 // pred_fallthru
          _
        %s203 = sand.u32 %s42, 1
        %s204 = scalar_lea.sflag [#allocation3], %s203
        %s205 = sand.u32 %s42, 1
        %s206 = smul.addr %s205, 8
        %s207 = scalar_lea.vmem [#allocation2], %s206
        %p208 = pneg %p55
        %p209 = pneg %p52
        %s210 = smul.u32 2, %s25
        %p211 = scmp.lt.s32.totalorder %s24, 1
        %s212 = scalar_select %p211, %s24, 1
        %p213 = scmp.lt.s32.totalorder %s210, 1
        %s214 = scalar_select %p213, %s210, 1
        %s215 = smul.addr %s212, 2
        %s216 = sadd.s32 %s214, %s215
        %s217 = scalar_lea.vmem %s1, %s216
        %p218 = pneg %p83
        %p219 = pneg %p80
        %p220 = pneg %p104
        %p221 = pneg %p101
        %p222 = pneg %p132
        %p223 = pneg %p129
        %s224 = sand.u32 %s119, 1
        %s225 = scalar_lea.sflag [#allocation4], %s224
        %s226 = sand.u32 %s119, 1
        %s227 = scalar_lea.vmem [#allocation5], %s226
        %s228 = smul.u32 2, %s25
        %s229 = smul.u32 2, %s25
        %p230 = scmp.lt.s32.totalorder %s24, 1
        %s231 = scalar_select %p230, %s24, 1
        %p232 = scmp.lt.s32.totalorder %s229, 1
        %s233 = scalar_select %p232, %s229, 1
        %s234 = smul.addr %s231, 2
        %s235 = sadd.s32 %s233, %s234
        %s236 = scalar_lea.vmem %s1, %s235
        %s237 = smul.u32 2, %s25
        %v238 = vld [vmem:[%s198] sm:$0xff]
        %v239 = vld [vmem:[%s236] sm:$0x3]
        %v240 = vld [vmem:[%s2] sm:$0xf]
        %v242 = vcombine.high %v238, %v238
        %vm244 = vcmask 1043456
        %v245 = vsel %vm244, %v238, -inf
        %v246 = vrot.slane %v245, 4
        %v247 = vmax.f32 %v245, %v246
        %v248 = vrot.slane %v247, 2
        %v249 = vmax.f32 %v247, %v248
        %v250 = vrot.slane %v249, 1
        %v251 = vmax.f32 %v249, %v250
        %v252 = vsel %vm244, %v242, -inf
        %v253 = vrot.slane %v252, 4
        %v254 = vmax.f32 %v252, %v253
        %v255 = vrot.slane %v254, 2
        %v256 = vmax.f32 %v254, %v255
        %v257 = vrot.slane %v256, 1
        %v258 = vmax.f32 %v256, %v257
        %v261 = vcombine.low %v251, %v258
        %v263 = vsub.f32 %v238, %v261
        %v264 = vmul.f32 %v263, 1.442695
        %v265 = vpow.pop %v264
        %v267 = vcombine.high %v265, %v265
        %v269 = vsel %vm244, %v265, 0.0
        %v270 = vrot.slane %v269, 4
        %v271 = vadd.f32 %v269, %v270
        %v272 = vrot.slane %v271, 2
        %v273 = vadd.f32 %v271, %v272
        %v274 = vrot.slane %v273, 1
        %v275 = vadd.f32 %v273, %v274
        %v276 = vsel %vm244, %v267, 0.0
        %v277 = vrot.slane %v276, 4
        %v278 = vadd.f32 %v276, %v277
        %v279 = vrot.slane %v278, 2
        %v280 = vadd.f32 %v278, %v279
        %v281 = vrot.slane %v280, 1
        %v282 = vadd.f32 %v280, %v281
        %v285 = vcombine.low %v275, %v282
        %v287 = vrcp.pop %v285
        %v288 = vmul.f32 %v265, %v287
        %v289 = vlaneseq
        %v290 = vshrl.u32 %v289, 7
        %v291 = vlaneseq
        %v292 = vshrl.u32 %v291, 7
        %v293 = vsub.s32 0, %v292
        %v294 = vrot.slane %v239, %v293
        %v295 = vlaneseq
        %v296 = vshrl.u32 %v295, 7
        %v297 = vsub.s32 1, %v296
        %v298 = vrot.slane %v239, %v297
        %vm299 = vcmp.eq.s32.totalorder %v290, %v294
        %vm300 = vcmp.eq.s32.totalorder %v290, %v298
        %v301 = vsel %vm299, 1, 0
        %v302 = vsel %vm300, 1, 0
        %v303 = vcvt.s32.f32 %v301
        %v304 = vcvt.s32.f32 %v302
        %v307 = vcombine.low %v303, %v304
        %v309 = vmul.f32 %v288, %v307
        %v311 = vcombine.high %v309, %v309
        %v313 = vsel %vm244, %v309, 0.0
        %v314 = vrot.slane %v313, 4
        %v315 = vadd.f32 %v313, %v314
        %v316 = vrot.slane %v315, 2
        %v317 = vadd.f32 %v315, %v316
        %v318 = vrot.slane %v317, 1
        %v319 = vadd.f32 %v317, %v318
        %v320 = vsel %vm244, %v311, 0.0
        %v321 = vrot.slane %v320, 4
        %v322 = vadd.f32 %v320, %v321
        %v323 = vrot.slane %v322, 2
        %v324 = vadd.f32 %v322, %v323
        %v325 = vrot.slane %v324, 1
        %v326 = vadd.f32 %v324, %v325
        %v327 = vadd.f32 %v319, 0.0001
        %v328 = vadd.f32 %v326, 0.0001
        %v329 = vlog2.pop %v327
        %v330 = vmul.f32 %v329, 0.6931472
        %v331 = vlog2.pop %v328
        %v332 = vmul.f32 %v331, 0.6931472
        %334 = vset.pattern.permute.xlu0 0
        %335 = vperm.xlu0 %334, %v240
        %v336 = vpop.permute.xlu0 %335
        %v338 = vmul.f32 %v336, %v303
        %v339 = vmul.f32 %v336, %v304
        %v340 = vsel %vm244, %v338, 0.0
        %v341 = vrot.slane %v340, 4
        %v342 = vadd.f32 %v340, %v341
        %v343 = vrot.slane %v342, 2
        %v344 = vadd.f32 %v342, %v343
        %v345 = vrot.slane %v344, 1
        %v346 = vadd.f32 %v344, %v345
        %v347 = vsel %vm244, %v339, 0.0
        %v348 = vrot.slane %v347, 4
        %v349 = vadd.f32 %v347, %v348
        %v350 = vrot.slane %v349, 2
        %v351 = vadd.f32 %v349, %v350
        %v352 = vrot.slane %v351, 1
        %v353 = vadd.f32 %v351, %v352
        %v354 = vsub.f32 1.0, %v327
        %v355 = vsub.f32 1.0, %v328
        %v356 = vmul.f32 %v354, %v354
        %v357 = vmul.f32 %v355, %v355
        %v358 = vsub.f32 0.0, %v346
        %v359 = vsub.f32 0.0, %v353
        %v360 = vmul.f32 %v358, %v356
        %v361 = vmul.f32 %v359, %v357
        %v362 = vmul.f32 %v360, %v330
        %v363 = vmul.f32 %v361, %v332
        %vm364 = vcmask 1040384
        %v365 = vsel %vm364, %v362, 0.0
        %v366 = vsel %vm364, %v363, 0.0
        %v367 = vadd.f32 %v365, %v366
        %368 = vadd.xlane.f32.xlu0 %v367
        %v369 = vpop.xlane.xlu0 %368
        %v370 = vrot.slane %v369, 4
        %v371 = vadd.f32 %v369, %v370
        %v372 = vrot.slane %v371, 2
        %v373 = vadd.f32 %v371, %v372
        %v374 = vrot.slane %v373, 1
        %v375 = vadd.f32 %v373, %v374
        %s376 = vtos %v375
        %v377 = vstv %s376
        %378 = vst [vmem:[%s227] sm:$0x1] %v377
        %s379 = sand.u32 %s119, 1
        %s380 = scalar_lea.sflag [#allocation4], %s379
        %s381 = sand.u32 %s119, 1
        %s382 = scalar_lea.vmem [#allocation5], %s381
        // Predicated region
        $region37: #{tpu_custom_call.1} parent=31 // pred_check
          %p383 = pneg %p129
        $region38: #{tpu_custom_call.1} parent=31 // pred_check_branch
          %385 = sbr.rel (%p383) target = $region40
        $region39: #{tpu_custom_call.1} parent=31 // pred_region
          %s387 = ssub.s32 16, 16
          %388 = vsyncadd %s380, %s387
          %s389 = sadd.s32 %s25, %s24
          %s390 = smul.addr %s389, 16
          %s391 = scalar_lea.hbm %s3, %s390
          %s393 = sshll.u32 %s382, 4
          %s394 = int_to_ptr.vmem [resolvable:$true] %s393
          %396 = dma.vmem_to_hbm [thread:$0]  %s394, 16, %s391, %s380
        $region40: #{tpu_custom_call.1} parent=31 // pred_fallthru
          _
      $region32: #{tpu_custom_call.1} parent=5 // pred_fallthru
        _
      %p397 = scmp.le.s32.totalorder 2, %s15
      // Predicated region
      $region41: #{tpu_custom_call.1} parent=5 // pred_check
        %p398 = pneg %p397
      $region42: #{tpu_custom_call.1} parent=5 // pred_check_branch
        %400 = sbr.rel (%p398) target = $region44
      $region43: #{tpu_custom_call.1} parent=5 // pred_region
        %s401 = ssub.s32 %s15, 2
        // Predicated region
        $region45: #{tpu_custom_call.1} parent=43 // pred_check
          %p402 = pneg %p135
        $region46: #{tpu_custom_call.1} parent=43 // pred_check_branch
          %404 = sbr.rel (%p402) target = $region48
        $region47: #{tpu_custom_call.1} parent=43 // pred_region
          %s405 = sand.u32 %s120, 1
          %s406 = scalar_lea.sflag [#allocation4], %s405
          %s407 = sand.u32 %s120, 1
          %s408 = scalar_lea.vmem [#allocation5], %s407
          %409 = dma.done %s406, 16
        $region48: #{tpu_custom_call.1} parent=43 // pred_fallthru
          _
      $region44: #{tpu_custom_call.1} parent=5 // pred_fallthru
        _
    $region6: #{tpu_custom_call.1} parent=1 // loop_footer
      %s19 = sadd.s32 1, %s15
    $region7: #{tpu_custom_call.1} parent=1 // loop_footer_branch
      %14 = sbr.rel target = $region3
    $region8: #{tpu_custom_call.1} parent=1 // loop_exit
      _
    %410 = vsyncpa [#allocation3], 1
    %s411 = scalar_lea.sflag [#allocation3], 1
    %412 = vsyncpa %s411, 1
    %413 = vsyncpa [#allocation4], 1
    %s414 = scalar_lea.sflag [#allocation4], 1
    %415 = vsyncpa %s414, 1

</llo_original>
